<compile_context>
chip_gen: v5e
topology: v5e:2x2
jax: 0.10.0
libtpu: 0.0.40
codegen_flags: <defaults>
</compile_context>

<pallas_src>
import functools

import jax
import jax.numpy as jnp
from jax.experimental import pallas as pl
from jax.experimental.pallas import tpu as pltpu


def _round_up(n, m):
    return ((n + m - 1) // m) * m


def mlp_kernel(x_ref,
               w1_ref, b1_ref,
               w2_ref, b2_ref,
               w3_ref, b3_ref,
               w4_ref, b4_ref,
               o_ref):
    x = x_ref[...]  # (TB, 3) f32

    # fc1 + relu: K=3 is far too shallow for the MXU -> three VPU FMAs (exact f32).
    h = (x[:, 0:1] * w1_ref[0:1, :]
         + x[:, 1:2] * w1_ref[1:2, :]
         + x[:, 2:3] * w1_ref[2:3, :]
         + b1_ref[...])
    h = jnp.maximum(h, 0.0)

    # fc2 + relu (f32 MXU, f32 accumulation)
    h = jnp.dot(h, w2_ref[...], preferred_element_type=jnp.float32)
    h = jnp.maximum(h + b2_ref[...], 0.0)

    # fc3 + tanh
    h = jnp.dot(h, w3_ref[...], preferred_element_type=jnp.float32)
    h = jnp.tanh(h + b3_ref[...])

    # fc4 (logits, width 6)
    h = jnp.dot(h, w4_ref[...], preferred_element_type=jnp.float32)
    o_ref[...] = (h + b4_ref[...]).astype(o_ref.dtype)


@functools.partial(jax.jit, static_argnames=("tb",))
def neural_net_forward(x, params, tb=2048):
    """x: [B, 3] float32; params: dict name -> (w [in,out], b [1,out]). Returns [B, 6]."""
    B = x.shape[0]
    w1, b1 = params["fc1"]
    w2, b2 = params["fc2"]
    w3, b3 = params["fc3"]
    w4, b4 = params["fc4"]
    n_out = w4.shape[1]

    # Batch tiling: TB multiple of 8, pad B up to a multiple of TB.
    # TB=2048 keeps per-step buffers at ~a few MiB (safe for v7x's 64 MiB VMEM)
    # while amortizing the ~0.35 us per-grid-step overhead on v5e/v6e.
    TB = _round_up(max(8, min(tb, _round_up(B, 8))), 8)
    Bp = _round_up(B, TB)
    if Bp != B:
        x = jnp.pad(x, ((0, Bp - B), (0, 0)))

    def resident(a):  # full-extent block, same VMEM copy every grid step
        return pl.BlockSpec(a.shape, lambda i: (0,) * a.ndim)

    weights = (w1, b1, w2, b2, w3, b3, w4, b4)

    out = pl.pallas_call(
        mlp_kernel,
        out_shape=jax.ShapeDtypeStruct((Bp, n_out), jnp.float32),
        grid=(Bp // TB,),
        in_specs=[pl.BlockSpec((TB, 3), lambda i: (i, 0))]
                 + [resident(a) for a in weights],
        out_specs=pl.BlockSpec((TB, n_out), lambda i: (i, 0)),
        compiler_params=pltpu.CompilerParams(
            dimension_semantics=("parallel",)),
    )(x, *weights)

    return out[:B, :]


def init_params(key):
    """Deterministic init matching the PyTorch layer shapes (stored transposed)."""
    dims = [(3, 32), (32, 64), (64, 128), (128, 6)]
    names = ["fc1", "fc2", "fc3", "fc4"]
    params = {}
    for name, (fan_in, fan_out) in zip(names, dims):
        key, kw, kb = jax.random.split(key, 3)
        bound = 1.0 / jnp.sqrt(fan_in)  # PyTorch default Linear init range
        w = jax.random.uniform(kw, (fan_in, fan_out), jnp.float32, -bound, bound)
        b = jax.random.uniform(kb, (1, fan_out), jnp.float32, -bound, bound)
        params[name] = (w, b)
    return params


def reference_forward(x, params):
    """Pure f32 reference (HIGHEST precision dots) matching the PyTorch module."""
    p = jax.lax.Precision.HIGHEST
    w1, b1 = params["fc1"]
    w2, b2 = params["fc2"]
    w3, b3 = params["fc3"]
    w4, b4 = params["fc4"]
    h = jnp.maximum(jnp.dot(x, w1, precision=p) + b1, 0.0)
    h = jnp.maximum(jnp.dot(h, w2, precision=p) + b2, 0.0)
    h = jnp.tanh(jnp.dot(h, w3, precision=p) + b3)
    return jnp.dot(h, w4, precision=p) + b4


if __name__ == "__main__":
    key = jax.random.PRNGKey(0)
    key, kx = jax.random.split(key)

    # Small primary check: single tile.
    B = 8
    x = jax.random.normal(kx, (B, 3), dtype=jnp.float32)
    params = init_params(key)

    out = jax.block_until_ready(neural_net_forward(x, params))
    assert out.shape == (B, 6), out.shape

    ref = reference_forward(x, params)
    err = float(jnp.max(jnp.abs(out - ref)))
    # Tolerance leaves headroom for MXU multi-pass f32 rounding; still catches
    # any real bug (wrong weight/layer/transpose gives O(1) errors).
    assert jnp.allclose(out, ref, atol=1e-2, rtol=1e-2), \
        f"mismatch vs f32 reference (max |diff| = {err})"

    # Multi-tile + ragged-tail path (the previously failing configuration,
    # exercised at a small size): grid of 3 batch tiles with padding.
    key, kx2 = jax.random.split(key)
    B2 = 300  # not a multiple of TB=128 -> exercises padding + slicing
    x2 = jax.random.normal(kx2, (B2, 3), dtype=jnp.float32)
    out2 = jax.block_until_ready(neural_net_forward(x2, params, tb=128))
    ref2 = reference_forward(x2, params)
    err2 = float(jnp.max(jnp.abs(out2 - ref2)))
    assert out2.shape == (B2, 6), out2.shape
    assert jnp.allclose(out2, ref2, atol=1e-2, rtol=1e-2), \
        f"mismatch vs f32 reference on tiled batch (max |diff| = {err2})"

    print("KERNEL_OK")
</pallas_src>

<mosaic_0001>
module attributes {stable_mosaic.version = 11 : i64} {
  func.func @mlp_kernel(%arg0: i32, %arg1: memref<8x3xf32, #tpu.memory_space<vmem>>, %arg2: memref<3x32xf32, #tpu.memory_space<vmem>>, %arg3: memref<1x32xf32, #tpu.memory_space<vmem>>, %arg4: memref<32x64xf32, #tpu.memory_space<vmem>>, %arg5: memref<1x64xf32, #tpu.memory_space<vmem>>, %arg6: memref<64x128xf32, #tpu.memory_space<vmem>>, %arg7: memref<1x128xf32, #tpu.memory_space<vmem>>, %arg8: memref<128x6xf32, #tpu.memory_space<vmem>>, %arg9: memref<1x6xf32, #tpu.memory_space<vmem>>, %arg10: memref<8x6xf32, #tpu.memory_space<vmem>>) attributes {dimension_semantics = [#tpu.dimension_semantics<parallel>], iteration_bounds = array<i64: 1>, scalar_prefetch = 0 : i64, scratch_operands = 0 : i64, tpu.core_type = #tpu.core_type<tc>, window_params = [{transform_indices = @transform_0, window_bounds = array<i64: 8, 3>}, {pipeline_mode = #tpu.pipeline_mode<synchronous>, transform_indices = @transform_1, window_bounds = array<i64: 3, 32>}, {pipeline_mode = #tpu.pipeline_mode<synchronous>, transform_indices = @transform_2, window_bounds = array<i64: 1, 32>}, {pipeline_mode = #tpu.pipeline_mode<synchronous>, transform_indices = @transform_3, window_bounds = array<i64: 32, 64>}, {pipeline_mode = #tpu.pipeline_mode<synchronous>, transform_indices = @transform_4, window_bounds = array<i64: 1, 64>}, {pipeline_mode = #tpu.pipeline_mode<synchronous>, transform_indices = @transform_5, window_bounds = array<i64: 64, 128>}, {pipeline_mode = #tpu.pipeline_mode<synchronous>, transform_indices = @transform_6, window_bounds = array<i64: 1, 128>}, {pipeline_mode = #tpu.pipeline_mode<synchronous>, transform_indices = @transform_7, window_bounds = array<i64: 128, 6>}, {pipeline_mode = #tpu.pipeline_mode<synchronous>, transform_indices = @transform_8, window_bounds = array<i64: 1, 6>}, {transform_indices = @transform_9, window_bounds = array<i64: 8, 6>}]} {
    %c0 = arith.constant 0 : index
    %c0_0 = arith.constant 0 : index
    %0 = vector.load %arg1[%c0, %c0_0] : memref<8x3xf32, #tpu.memory_space<vmem>>, vector<8x3xf32>
    %1 = vector.extract_strided_slice %0 {offsets = [0, 0], sizes = [8, 1], strides = [1, 1]} : vector<8x3xf32> to vector<8x1xf32>
    %c0_1 = arith.constant 0 : index
    %c0_2 = arith.constant 0 : index
    %2 = vector.load %arg2[%c0_1, %c0_2] : memref<3x32xf32, #tpu.memory_space<vmem>>, vector<1x32xf32>
    %3 = vector.broadcast %1 : vector<8x1xf32> to vector<8x32xf32>
    %4 = vector.broadcast %2 : vector<1x32xf32> to vector<8x32xf32>
    %5 = arith.mulf %3, %4 : vector<8x32xf32>
    %6 = vector.extract_strided_slice %0 {offsets = [0, 1], sizes = [8, 1], strides = [1, 1]} : vector<8x3xf32> to vector<8x1xf32>
    %c1 = arith.constant 1 : index
    %c0_3 = arith.constant 0 : index
    %7 = vector.load %arg2[%c1, %c0_3] : memref<3x32xf32, #tpu.memory_space<vmem>>, vector<1x32xf32>
    %8 = vector.broadcast %6 : vector<8x1xf32> to vector<8x32xf32>
    %9 = vector.broadcast %7 : vector<1x32xf32> to vector<8x32xf32>
    %10 = arith.mulf %8, %9 : vector<8x32xf32>
    %11 = arith.addf %5, %10 : vector<8x32xf32>
    %12 = vector.extract_strided_slice %0 {offsets = [0, 2], sizes = [8, 1], strides = [1, 1]} : vector<8x3xf32> to vector<8x1xf32>
    %c2 = arith.constant 2 : index
    %c0_4 = arith.constant 0 : index
    %13 = vector.load %arg2[%c2, %c0_4] : memref<3x32xf32, #tpu.memory_space<vmem>>, vector<1x32xf32>
    %14 = vector.broadcast %12 : vector<8x1xf32> to vector<8x32xf32>
    %15 = vector.broadcast %13 : vector<1x32xf32> to vector<8x32xf32>
    %16 = arith.mulf %14, %15 : vector<8x32xf32>
    %17 = arith.addf %11, %16 : vector<8x32xf32>
    %c0_5 = arith.constant 0 : index
    %c0_6 = arith.constant 0 : index
    %18 = vector.load %arg3[%c0_5, %c0_6] : memref<1x32xf32, #tpu.memory_space<vmem>>, vector<1x32xf32>
    %19 = vector.broadcast %18 : vector<1x32xf32> to vector<8x32xf32>
    %20 = arith.addf %17, %19 : vector<8x32xf32>
    %cst = arith.constant 0.000000e+00 : f32
    %21 = vector.broadcast %cst : f32 to vector<8x32xf32>
    %22 = arith.maximumf %20, %21 : vector<8x32xf32>
    %c0_7 = arith.constant 0 : index
    %c0_8 = arith.constant 0 : index
    %23 = vector.load %arg4[%c0_7, %c0_8] : memref<32x64xf32, #tpu.memory_space<vmem>>, vector<32x64xf32>
    %cst_9 = arith.constant dense<0.000000e+00> : vector<8x64xf32>
    %24 = tpu.matmul %22, %23, %cst_9 {dimension_numbers = #tpu.dot_dimension_numbers<[1], [0], [0], [1], [0, 0, 1, 1], [], []>} : vector<8x32xf32>, vector<32x64xf32>, vector<8x64xf32> -> vector<8x64xf32>
    %c0_10 = arith.constant 0 : index
    %c0_11 = arith.constant 0 : index
    %25 = vector.load %arg5[%c0_10, %c0_11] : memref<1x64xf32, #tpu.memory_space<vmem>>, vector<1x64xf32>
    %26 = vector.broadcast %25 : vector<1x64xf32> to vector<8x64xf32>
    %27 = arith.addf %24, %26 : vector<8x64xf32>
    %cst_12 = arith.constant 0.000000e+00 : f32
    %28 = vector.broadcast %cst_12 : f32 to vector<8x64xf32>
    %29 = arith.maximumf %27, %28 : vector<8x64xf32>
    %c0_13 = arith.constant 0 : index
    %c0_14 = arith.constant 0 : index
    %30 = vector.load %arg6[%c0_13, %c0_14] : memref<64x128xf32, #tpu.memory_space<vmem>>, vector<64x128xf32>
    %cst_15 = arith.constant dense<0.000000e+00> : vector<8x128xf32>
    %31 = tpu.matmul %29, %30, %cst_15 {dimension_numbers = #tpu.dot_dimension_numbers<[1], [0], [0], [1], [0, 0, 1, 1], [], []>} : vector<8x64xf32>, vector<64x128xf32>, vector<8x128xf32> -> vector<8x128xf32>
    %c0_16 = arith.constant 0 : index
    %c0_17 = arith.constant 0 : index
    %32 = vector.load %arg7[%c0_16, %c0_17] : memref<1x128xf32, #tpu.memory_space<vmem>>, vector<1x128xf32>
    %33 = vector.broadcast %32 : vector<1x128xf32> to vector<8x128xf32>
    %34 = arith.addf %31, %33 : vector<8x128xf32>
    %35 = math.tanh %34 : vector<8x128xf32>
    %c0_18 = arith.constant 0 : index
    %c0_19 = arith.constant 0 : index
    %36 = vector.load %arg8[%c0_18, %c0_19] : memref<128x6xf32, #tpu.memory_space<vmem>>, vector<128x6xf32>
    %cst_20 = arith.constant dense<0.000000e+00> : vector<8x6xf32>
    %37 = tpu.matmul %35, %36, %cst_20 {dimension_numbers = #tpu.dot_dimension_numbers<[1], [0], [0], [1], [0, 0, 1, 1], [], []>} : vector<8x128xf32>, vector<128x6xf32>, vector<8x6xf32> -> vector<8x6xf32>
    %c0_21 = arith.constant 0 : index
    %c0_22 = arith.constant 0 : index
    %38 = vector.load %arg9[%c0_21, %c0_22] : memref<1x6xf32, #tpu.memory_space<vmem>>, vector<1x6xf32>
    %39 = vector.broadcast %38 : vector<1x6xf32> to vector<8x6xf32>
    %40 = arith.addf %37, %39 : vector<8x6xf32>
    %c0_23 = arith.constant 0 : index
    %c0_24 = arith.constant 0 : index
    %41 = vector.load %arg10[%c0_23, %c0_24] : memref<8x6xf32, #tpu.memory_space<vmem>>, vector<8x6xf32>
    tpu.vector_store %arg10[%c0_23, %c0_24], %40 {strides = array<i32>} : memref<8x6xf32, #tpu.memory_space<vmem>>, vector<8x6xf32>,
    return
  }
  func.func @transform_0(%arg0: i32) -> (i32, i32) {
    %c0_i32 = arith.constant 0 : i32
    %c0_i32_0 = arith.constant 0 : i32
    return %arg0, %c0_i32 : i32, i32
  }
  func.func @transform_1(%arg0: i32) -> (i32, i32) {
    %c0_i32 = arith.constant 0 : i32
    %c0_i32_0 = arith.constant 0 : i32
    %c0_i32_1 = arith.constant 0 : i32
    return %c0_i32, %c0_i32_0 : i32, i32
  }
  func.func @transform_2(%arg0: i32) -> (i32, i32) {
    %c0_i32 = arith.constant 0 : i32
    %c0_i32_0 = arith.constant 0 : i32
    %c0_i32_1 = arith.constant 0 : i32
    return %c0_i32, %c0_i32_0 : i32, i32
  }
  func.func @transform_3(%arg0: i32) -> (i32, i32) {
    %c0_i32 = arith.constant 0 : i32
    %c0_i32_0 = arith.constant 0 : i32
    %c0_i32_1 = arith.constant 0 : i32
    return %c0_i32, %c0_i32_0 : i32, i32
  }
  func.func @transform_4(%arg0: i32) -> (i32, i32) {
    %c0_i32 = arith.constant 0 : i32
    %c0_i32_0 = arith.constant 0 : i32
    %c0_i32_1 = arith.constant 0 : i32
    return %c0_i32, %c0_i32_0 : i32, i32
  }
  func.func @transform_5(%arg0: i32) -> (i32, i32) {
    %c0_i32 = arith.constant 0 : i32
    %c0_i32_0 = arith.constant 0 : i32
    %c0_i32_1 = arith.constant 0 : i32
    return %c0_i32, %c0_i32_0 : i32, i32
  }
  func.func @transform_6(%arg0: i32) -> (i32, i32) {
    %c0_i32 = arith.constant 0 : i32
    %c0_i32_0 = arith.constant 0 : i32
    %c0_i32_1 = arith.constant 0 : i32
    return %c0_i32, %c0_i32_0 : i32, i32
  }
  func.func @transform_7(%arg0: i32) -> (i32, i32) {
    %c0_i32 = arith.constant 0 : i32
    %c0_i32_0 = arith.constant 0 : i32
    %c0_i32_1 = arith.constant 0 : i32
    return %c0_i32, %c0_i32_0 : i32, i32
  }
  func.func @transform_8(%arg0: i32) -> (i32, i32) {
    %c0_i32 = arith.constant 0 : i32
    %c0_i32_0 = arith.constant 0 : i32
    %c0_i32_1 = arith.constant 0 : i32
    return %c0_i32, %c0_i32_0 : i32, i32
  }
  func.func @transform_9(%arg0: i32) -> (i32, i32) {
    %c0_i32 = arith.constant 0 : i32
    %c0_i32_0 = arith.constant 0 : i32
    return %arg0, %c0_i32 : i32, i32
  }
}

</mosaic_0001>

<llo_original>
// kernel: neural_net_forward.1
$region0: #{neural_net_forward.1}
  #allocation0 [shape = 'u32[]', space=smem, size = 0x4, offset = 0x4, fixed_abs, tag = 'smem constant byte address 0x4 - core index']
  #allocation1 [shape = 'u32[72,128]{1,0:T(1,128)}', space=vmem, size = 0x9000, scoped, tag = 'internal scratch']
  %s0 = inlined_call_operand.vmem [shape: f32[8,3], index: 0, kind: input, shape index: {}]
  %s1 = inlined_call_operand.vmem [shape: f32[3,32], index: 1, kind: input, shape index: {}]
  %s2 = inlined_call_operand.vmem [shape: f32[1,32], index: 2, kind: input, shape index: {}]
  %s3 = inlined_call_operand.vmem [shape: f32[32,64], index: 3, kind: input, shape index: {}]
  %s4 = inlined_call_operand.vmem [shape: f32[1,64], index: 4, kind: input, shape index: {}]
  %s5 = inlined_call_operand.vmem [shape: f32[64,128], index: 5, kind: input, shape index: {}]
  %s6 = inlined_call_operand.vmem [shape: f32[1,128], index: 6, kind: input, shape index: {}]
  %s7 = inlined_call_operand.vmem [shape: f32[128,6], index: 7, kind: input, shape index: {}]
  %s8 = inlined_call_operand.vmem [shape: f32[1,6], index: 8, kind: input, shape index: {}]
  %s9 = inlined_call_operand.hbm [shape: f32[8,6], index: 9, kind: output, shape index: {}]
  %s10 = sld [smem:[#allocation0]]
  $region46: #{neural_net_forward.1} parent=0
    _
  %s12 = ssub.s32 1, %s10
  %s13 = scalar_select 0, %s12, %s10
  $region1: #{neural_net_forward.1} parent=0
    #allocation2 [shape = 'u8[4096]{0}', space=vmem, size = 0x1000, scoped, tag = 'output window, operand 0, single buffered']
    #allocation3 [shape = 's32[1]{0}', space=sflag, size = 0x4, scoped, tag = 'scoped memory for neural_net_forward.1']
    %14 = vsyncpa [#allocation3], 0
    // Predicated region
    $region2: #{neural_net_forward.1} parent=1 // pred_check
      _
    $region3: #{neural_net_forward.1} parent=1 // pred_check_branch
      %16 = sbr.rel (0) target = $region5
    $region4: #{neural_net_forward.1} parent=1 // pred_region
      _
    $region5: #{neural_net_forward.1} parent=1 // pred_fallthru
      _
    // Predicated region
    $region6: #{neural_net_forward.1} parent=1 // pred_check
      _
    $region7: #{neural_net_forward.1} parent=1 // pred_check_branch
      %18 = sbr.rel (0) target = $region9
    $region8: #{neural_net_forward.1} parent=1 // pred_region
      _
    $region9: #{neural_net_forward.1} parent=1 // pred_fallthru
      _
    // Predicated region
    $region10: #{neural_net_forward.1} parent=1 // pred_check
      _
    $region11: #{neural_net_forward.1} parent=1 // pred_check_branch
      %20 = sbr.rel (0) target = $region13
    $region12: #{neural_net_forward.1} parent=1 // pred_region
      _
    $region13: #{neural_net_forward.1} parent=1 // pred_fallthru
      _
    // Predicated region
    $region14: #{neural_net_forward.1} parent=1 // pred_check
      _
    $region15: #{neural_net_forward.1} parent=1 // pred_check_branch
      %22 = sbr.rel (0) target = $region17
    $region16: #{neural_net_forward.1} parent=1 // pred_region
      _
    $region17: #{neural_net_forward.1} parent=1 // pred_fallthru
      _
    // Predicated region
    $region18: #{neural_net_forward.1} parent=1 // pred_check
      _
    $region19: #{neural_net_forward.1} parent=1 // pred_check_branch
      %24 = sbr.rel (0) target = $region21
    $region20: #{neural_net_forward.1} parent=1 // pred_region
      _
    $region21: #{neural_net_forward.1} parent=1 // pred_fallthru
      _
    // Predicated region
    $region22: #{neural_net_forward.1} parent=1 // pred_check
      _
    $region23: #{neural_net_forward.1} parent=1 // pred_check_branch
      %26 = sbr.rel (0) target = $region25
    $region24: #{neural_net_forward.1} parent=1 // pred_region
      _
    $region25: #{neural_net_forward.1} parent=1 // pred_fallthru
      _
    // Predicated region
    $region26: #{neural_net_forward.1} parent=1 // pred_check
      _
    $region27: #{neural_net_forward.1} parent=1 // pred_check_branch
      %28 = sbr.rel (0) target = $region29
    $region28: #{neural_net_forward.1} parent=1 // pred_region
      _
    $region29: #{neural_net_forward.1} parent=1 // pred_fallthru
      _
    // Predicated region
    $region30: #{neural_net_forward.1} parent=1 // pred_check
      _
    $region31: #{neural_net_forward.1} parent=1 // pred_check_branch
      %30 = sbr.rel (0) target = $region33
    $region32: #{neural_net_forward.1} parent=1 // pred_region
      _
    $region33: #{neural_net_forward.1} parent=1 // pred_fallthru
      _
    // Predicated region
    $region34: #{neural_net_forward.1} parent=1 // pred_check
      _
    $region35: #{neural_net_forward.1} parent=1 // pred_check_branch
      %32 = sbr.rel (0) target = $region37
    $region36: #{neural_net_forward.1} parent=1 // pred_region
      _
    $region37: #{neural_net_forward.1} parent=1 // pred_fallthru
      _
    %v33 = vld [vmem:[%s0] sm:$0xff]
    %v34 = vld [vmem:[%s1] sm:$0x1]
    %36 = vset.pattern.permute.xlu0 0
    %37 = vperm.xlu0 %36, %v33
    %v38 = vpop.permute.xlu0 %37
    %v40 = vperm.slane %v34, 0
    %v41 = vmul.f32 %v38, %v40
    %v42 = vld [vmem:[%s1 + $0x1] sm:$0x1]
    %43 = vset.pattern.permute.xlu0 1
    %44 = vperm.xlu0 %43, %v33
    %v45 = vpop.permute.xlu0 %44
    %v47 = vperm.slane %v42, 0
    %v48 = vmul.f32 %v45, %v47
    %v49 = vadd.f32 %v41, %v48
    %v50 = vld [vmem:[%s1 + $0x2] sm:$0x1]
    %51 = vset.pattern.permute.xlu0 2
    %52 = vperm.xlu0 %51, %v33
    %v53 = vpop.permute.xlu0 %52
    %v55 = vperm.slane %v50, 0
    %v56 = vmul.f32 %v53, %v55
    %v57 = vadd.f32 %v49, %v56
    %v58 = vld [vmem:[%s2] sm:$0x1]
    %v60 = vperm.slane %v58, 0
    %v62 = vadd.f32 %v57, %v60
    %v63 = vmax.f32 %v62, 0.0
    %v64 = vld [vmem:[%s3] sm:$0xff]
    %v65 = vld [vmem:[%s3 + $0x8] sm:$0xff]
    %v66 = vld [vmem:[%s3 + $0x10] sm:$0xff]
    %v67 = vld [vmem:[%s3 + $0x18] sm:$0xff]
    %v68 = vld [vmem:[%s4] sm:$0x1]
    %v70 = vperm.slane %v68, 0
    %vm72 = vcmask 261120
    %v74 = vsel %vm72, %v63, 0
    %76 = vmatpush.msra.mxu0 0.0
    %77 = vmatpush.msra.mxu0 0.0
    %78 = vmatpush.msra.mxu0 0.0
    %79 = vmatpush.msra.mxu0 0.0
    %80 = vmatpush.msra.mxu0 0.0
    %81 = vmatpush.msra.mxu0 0.0
    %82 = vmatpush.msra.mxu0 0.0
    %83 = vmatpush.msra.mxu0 0.0
    %84 = vmatpush.msra.mxu0 0.0
    %85 = vmatpush.msra.mxu0 0.0
    %86 = vmatpush.msra.mxu0 0.0
    %87 = vmatpush.msra.mxu0 0.0
    %88 = vmatpush.msra.mxu0 %v67
    %89 = vmatpush.msra.mxu0 %v66
    %90 = vmatpush.msra.mxu0 %v65
    %91 = vmatpush.msra.mxu0 %v64
    %92 = vmatmul.f32.gmra.mxu0 %v74
    %v93 = vpop.f32.mrf.mxu0
    %v94 = vadd.f32 %v70, %v93
    %95 = vdwg.mxu0
    %v96 = vmax.f32 %v94, 0.0
    %v97 = vld [vmem:[%s5] sm:$0xff]
    %v98 = vld [vmem:[%s5 + $0x8] sm:$0xff]
    %v99 = vld [vmem:[%s5 + $0x10] sm:$0xff]
    %v100 = vld [vmem:[%s5 + $0x18] sm:$0xff]
    %v101 = vld [vmem:[%s5 + $0x20] sm:$0xff]
    %v102 = vld [vmem:[%s5 + $0x28] sm:$0xff]
    %v103 = vld [vmem:[%s5 + $0x30] sm:$0xff]
    %v104 = vld [vmem:[%s5 + $0x38] sm:$0xff]
    %v105 = vld [vmem:[%s6] sm:$0x1]
    %v107 = vperm.slane %v105, 0
    %vm109 = vcmask 523264
    %v111 = vsel %vm109, %v96, 0
    %113 = vmatpush.msra.mxu0 0.0
    %114 = vmatpush.msra.mxu0 0.0
    %115 = vmatpush.msra.mxu0 0.0
    %116 = vmatpush.msra.mxu0 0.0
    %117 = vmatpush.msra.mxu0 0.0
    %118 = vmatpush.msra.mxu0 0.0
    %119 = vmatpush.msra.mxu0 0.0
    %120 = vmatpush.msra.mxu0 0.0
    %121 = vmatpush.msra.mxu0 %v104
    %122 = vmatpush.msra.mxu0 %v103
    %123 = vmatpush.msra.mxu0 %v102
    %124 = vmatpush.msra.mxu0 %v101
    %125 = vmatpush.msra.mxu0 %v100
    %126 = vmatpush.msra.mxu0 %v99
    %127 = vmatpush.msra.mxu0 %v98
    %128 = vmatpush.msra.mxu0 %v97
    %129 = vmatmul.f32.gmra.mxu0 %v111
    %v130 = vpop.f32.mrf.mxu0
    %v131 = vadd.f32 %v107, %v130
    %132 = vdwg.mxu0
    %v133 = vtanh.pop %v131
    %v134 = vld [vmem:[%s7] sm:$0xff]
    %v135 = vld [vmem:[%s7 + $0x8] sm:$0xff]
    %v136 = vld [vmem:[%s7 + $0x10] sm:$0xff]
    %v137 = vld [vmem:[%s7 + $0x18] sm:$0xff]
    %v138 = vld [vmem:[%s7 + $0x20] sm:$0xff]
    %v139 = vld [vmem:[%s7 + $0x28] sm:$0xff]
    %v140 = vld [vmem:[%s7 + $0x30] sm:$0xff]
    %v141 = vld [vmem:[%s7 + $0x38] sm:$0xff]
    %v142 = vld [vmem:[%s7 + $0x40] sm:$0xff]
    %v143 = vld [vmem:[%s7 + $0x48] sm:$0xff]
    %v144 = vld [vmem:[%s7 + $0x50] sm:$0xff]
    %v145 = vld [vmem:[%s7 + $0x58] sm:$0xff]
    %v146 = vld [vmem:[%s7 + $0x60] sm:$0xff]
    %v147 = vld [vmem:[%s7 + $0x68] sm:$0xff]
    %v148 = vld [vmem:[%s7 + $0x70] sm:$0xff]
    %v149 = vld [vmem:[%s7 + $0x78] sm:$0xff]
    %v150 = vld [vmem:[%s8] sm:$0x1]
    %v152 = vperm.slane %v150, 0
    %154 = vmatpush.msra.mxu0 %v149
    %155 = vmatpush.msra.mxu0 %v148
    %156 = vmatpush.msra.mxu0 %v147
    %157 = vmatpush.msra.mxu0 %v146
    %158 = vmatpush.msra.mxu0 %v145
    %159 = vmatpush.msra.mxu0 %v144
    %160 = vmatpush.msra.mxu0 %v143
    %161 = vmatpush.msra.mxu0 %v142
    %162 = vmatpush.msra.mxu0 %v141
    %163 = vmatpush.msra.mxu0 %v140
    %164 = vmatpush.msra.mxu0 %v139
    %165 = vmatpush.msra.mxu0 %v138
    %166 = vmatpush.msra.mxu0 %v137
    %167 = vmatpush.msra.mxu0 %v136
    %168 = vmatpush.msra.mxu0 %v135
    %169 = vmatpush.msra.mxu0 %v134
    %170 = vmatmul.f32.gmra.mxu0 %v133
    %v171 = vpop.f32.mrf.mxu0
    %v172 = vadd.f32 %v152, %v171
    %173 = vdwg.mxu0
    %vm174 = vcmask 48128
    %175 = vst.msk [vmem:[#allocation2] sm:$0xff] %vm174, %v172
    // Predicated region
    $region38: #{neural_net_forward.1} parent=1 // pred_check
      _
    $region39: #{neural_net_forward.1} parent=1 // pred_check_branch
      %177 = sbr.rel (0) target = $region41
    $region40: #{neural_net_forward.1} parent=1 // pred_region
      %179 = vsyncadd [#allocation3], 0
      %s181 = sshll.u32 [#allocation2], 4
      %s182 = int_to_ptr.vmem [resolvable:$true] %s181
      %s183 = sshll.u32 %s9, 4
      %s184 = int_to_ptr.hbm [resolvable:$true] %s183
      %186 = dma.vmem_to_hbm [thread:$0]  %s182, 128, %s184, [#allocation3]
    $region41: #{neural_net_forward.1} parent=1 // pred_fallthru
      _
    // Predicated region
    $region42: #{neural_net_forward.1} parent=1 // pred_check
      _
    $region43: #{neural_net_forward.1} parent=1 // pred_check_branch
      %188 = sbr.rel (0) target = $region45
    $region44: #{neural_net_forward.1} parent=1 // pred_region
      %190 = dma.done [#allocation3], 128
    $region45: #{neural_net_forward.1} parent=1 // pred_fallthru
      _
    %191 = vsyncpa [#allocation3], 1

</llo_original>
